<compile_context>
chip_gen: v5e
topology: v5e:2x2
jax: 0.10.0
libtpu: 0.0.40
codegen_flags: <defaults>
</compile_context>

<pallas_src>
import functools

import numpy as np
import jax
import jax.numpy as jnp
from jax import lax
from jax.experimental import pallas as pl
from jax.experimental.pallas import tpu as pltpu

BIG = 1e30
K_NEIGHBORS = 40
BN_EPS = 1e-5

SPACE_DIM = 4
PROP_DIM = 22
SH_PAD = 32         # [ s (4) | h (22) | |s|^2 (1) | zero pad (5) ]
OUT_CH = 96
OUT_PAD = 128       # 96-wide features padded to one full 128-lane register
HIDDEN = 128


def _vmem():
    return pl.BlockSpec(memory_space=pltpu.MemorySpace.VMEM)


def _row_tile(n):
    """Row tile: multiple of 8 dividing n, >= 2 tiles whenever possible (so the
    'parallel' grid axis shards across v7x's two TensorCores and pipelining has
    something to overlap), capped so the (TM,N) f32 loop carries stay well
    inside VMEM even on v7x's 64 MiB part."""
    cap = max(8, min(256, n // 2))
    cap = min(cap, max(8, (12 * 1024 * 1024) // (24 * max(n, 1))))
    for t in (256, 128, 96, 64, 48, 32, 24, 16, 8):
        if t <= cap and n % t == 0:
            return t
    return n  # fallback: whole array (block == full dims is always legal)


# --------------------------------------------------------------------------
# Kernel 1: per-hit projection (lin_s | lin_h, |s|^2, lin_out1(x)) — hoisted
# out of the conv grid so it is computed exactly once per hit.
# --------------------------------------------------------------------------

def _project_kernel(x_ref, wsh_ref, bsh_ref, w1_ref, shs_ref, xw1_ref,
                    *, sdim, pdim):
    x = x_ref[...]                                                    # (TM, F)
    # space/feature projection kept in f32 so kNN distances match the reference
    shp = jnp.dot(x, wsh_ref[...], preferred_element_type=jnp.float32) \
        + bsh_ref[...]                                                # (TM, 32)
    s = shp[:, :sdim]
    sn = jnp.sum(s * s, axis=1, keepdims=True)                        # (TM, 1)
    cols = lax.broadcasted_iota(jnp.int32, shp.shape, 1)
    shs_ref[...] = jnp.where(cols == sdim + pdim, sn, shp)            # inject |s|^2
    # lin_out1(x) in bf16 (padded to 128 output lanes)
    xw1_ref[...] = jnp.dot(x.astype(jnp.bfloat16), w1_ref[...],
                           preferred_element_type=jnp.float32)        # (TM, 128)


# --------------------------------------------------------------------------
# Kernel 2: fused GravNetConv (pairwise d2, kNN aggregation, lin_out)
# --------------------------------------------------------------------------

def _gravnet_conv_kernel(shst_ref, xw1_ref, bcol_ref, shsf_ref, brow_ref,
                         w2_ref, w3_ref, bo_ref, o_ref, *, sdim, pdim, k):
    shs_t = shst_ref[...]                    # (TM, 32) query tile  [s|h|sn|0]
    shs_f = shsf_ref[...]                    # (N,  32) all hits (neighbour side)
    tm = shst_ref.shape[0]
    n = shsf_ref.shape[0]
    sn_col = sdim + pdim                     # column holding |s|^2

    # d2 = |s_t|^2 + |s_f|^2 - 2 s_t.s_f with the |s_f|^2 term folded into the
    # MXU matmul via an augmented query vector (no (N,1)->(1,N) XLU transpose).
    cols32 = lax.broadcasted_iota(jnp.int32, (tm, SH_PAD), 1)
    q_aug = jnp.where(cols32 < sdim, -2.0 * shs_t,
                      jnp.where(cols32 == sn_col, 1.0, 0.0))
    cross = lax.dot_general(q_aug, shs_f, (((1,), (1,)), ((), ())),
                            preferred_element_type=jnp.float32)       # (TM, N)
    sn_t = shs_t[:, sn_col:sn_col + 1]                                # (TM, 1)
    d2 = jnp.maximum(cross + sn_t, 0.0)

    # same-event mask: VPU broadcast compare of batch ids (no (N,N) HBM traffic)
    same = bcol_ref[...] == brow_ref[...]                             # (TM, N)
    cur0 = jnp.where(same, d2, BIG)          # never pick cross-event neighbours

    # loop-invariant values (NOT loop-carried)
    col_idx = lax.broadcasted_iota(jnp.int32, (tm, n), 1)
    h_f = shs_f[:, sdim:sn_col].astype(jnp.bfloat16)                  # (N, P)
    idx_bits = max(1, (n - 1).bit_length())
    key_mask = jnp.int32(-(1 << idx_bits))   # clears the low idx_bits bits

    mean0 = jnp.zeros((tm, pdim), jnp.float32)
    max0 = jnp.full((tm, pdim), -BIG, jnp.float32)
    cnt0 = jnp.zeros((tm, 1), jnp.float32)

    def body(_, carry):
        cur, cnt, mean_acc, max_acc = carry
        # ONE cross-lane reduce per pick: packed (distance | column) key is
        # order-preserving for non-negative f32; ties break to the lowest index.
        key = (pltpu.bitcast(cur, jnp.int32) & key_mask) | col_idx
        min_key = jnp.min(key, axis=1, keepdims=True)                 # (TM, 1)
        pick = key == min_key                                         # exact one-hot
        # exact selected distance (off the serial chain once unrolled)
        d_min = jnp.sum(jnp.where(pick, cur, 0.0), axis=1, keepdims=True)
        valid = d_min < (0.5 * BIG)          # event ran out of hits -> skip
        w = jnp.exp(-10.0 * d_min)           # only N*k exps total
        feat = jnp.dot(pick.astype(jnp.bfloat16), h_f,
                       preferred_element_type=jnp.float32)            # (TM, P) MXU
        wf = w * feat
        mean_acc = mean_acc + jnp.where(valid, wf, 0.0)
        max_acc = jnp.maximum(max_acc, jnp.where(valid, wf, -BIG))
        cnt = cnt + valid.astype(jnp.float32)
        cur = jnp.where(pick, BIG, cur)      # carry masked distances only
        return cur, cnt, mean_acc, max_acc

    _, cnt, mean_acc, max_acc = lax.fori_loop(
        0, k, body, (cur0, cnt0, mean0, max0), unroll=8)
    mean_agg = mean_acc / jnp.maximum(cnt, 1.0)

    # lin_out1(x) (precomputed) + lin_out2([mean | max]) without concatenation
    out = (xw1_ref[...]
           + jnp.dot(mean_agg.astype(jnp.bfloat16), w2_ref[...],
                     preferred_element_type=jnp.float32)
           + jnp.dot(max_acc.astype(jnp.bfloat16), w3_ref[...],
                     preferred_element_type=jnp.float32)
           + bo_ref[...])
    o_ref[...] = out                         # (TM, 128) lane-dense store


def gravnet_conv(x, batch_col, batch_row, p, k):
    n, f = x.shape
    sdim, pdim = p["space_dim"], p["prop_dim"]
    tm = _row_tile(n)
    grid = (n // tm,)

    # --- hoisted projection (once per hit) ---
    shs, xw1 = pl.pallas_call(
        functools.partial(_project_kernel, sdim=sdim, pdim=pdim),
        out_shape=(jax.ShapeDtypeStruct((n, SH_PAD), jnp.float32),
                   jax.ShapeDtypeStruct((n, OUT_PAD), jnp.float32)),
        grid=grid,
        in_specs=[
            pl.BlockSpec((tm, f), lambda i: (i, 0)),
            pl.BlockSpec(p["w_sh"].shape, lambda i: (0, 0)),
            pl.BlockSpec(p["b_sh"].shape, lambda i: (0, 0)),
            pl.BlockSpec(p["w1"].shape, lambda i: (0, 0)),
        ],
        out_specs=(pl.BlockSpec((tm, SH_PAD), lambda i: (i, 0)),
                   pl.BlockSpec((tm, OUT_PAD), lambda i: (i, 0))),
        compiler_params=pltpu.CompilerParams(
            dimension_semantics=("parallel",)),
    )(x, p["w_sh"], p["b_sh"], p["w1"])

    # --- fused conv over query-row tiles ---
    # TODO(synk): grid-invariant full-array inputs (shs, batch_row, weights) are
    # still double-buffered by the auto-pipeliner; single-buffering them would
    # buy extra VMEM headroom for bigger TM on v7x.
    return pl.pallas_call(
        functools.partial(_gravnet_conv_kernel, sdim=sdim, pdim=pdim, k=k),
        out_shape=jax.ShapeDtypeStruct((n, OUT_PAD), jnp.float32),
        grid=grid,
        in_specs=[
            pl.BlockSpec((tm, SH_PAD), lambda i: (i, 0)),     # projected query tile
            pl.BlockSpec((tm, OUT_PAD), lambda i: (i, 0)),    # lin_out1(x) tile
            pl.BlockSpec((tm, 1), lambda i: (i, 0)),          # batch id (query)
            pl.BlockSpec(shs.shape, lambda i: (0, 0)),        # projected all hits
            pl.BlockSpec(batch_row.shape, lambda i: (0, 0)),  # batch id row (1,N)
            pl.BlockSpec(p["w2"].shape, lambda i: (0, 0)),
            pl.BlockSpec(p["w3"].shape, lambda i: (0, 0)),
            pl.BlockSpec(p["b_out"].shape, lambda i: (0, 0)),
        ],
        out_specs=pl.BlockSpec((tm, OUT_PAD), lambda i: (i, 0)),
        compiler_params=pltpu.CompilerParams(
            dimension_semantics=("parallel",),
            vmem_limit_bytes=48 * 1024 * 1024),
    )(shs, xw1, batch_col, shs, batch_row, p["w2"], p["w3"], p["b_out"])


# --------------------------------------------------------------------------
# Kernel 3: fused tail = post_gravnet (BN->Lin->tanh->BN->Lin->tanh)
#                        + global_exchange + output (Lin->tanh->BN)
# --------------------------------------------------------------------------

def _bn(v, g, b):
    # nn.BatchNorm1d in (default) training mode: batch statistics, biased var.
    mu = jnp.mean(v, axis=0, keepdims=True)
    var = jnp.mean((v - mu) ** 2, axis=0, keepdims=True)
    return (v - mu) * lax.rsqrt(var + BN_EPS) * g + b


def _tail_kernel(x_ref, bm_ref, g1_ref, b1_ref, wa_ref, ba_ref,
                 g2_ref, b2_ref, wb_ref, bb_ref,
                 wm_ref, wmn_ref, wmx_ref, wx_ref, bo_ref, g3_ref, b3_ref,
                 o_ref, *, n_batches):
    x = x_ref[...]                                       # (N, 128) padded
    # ---- post_gravnet ----
    h = _bn(x, g1_ref[...], b1_ref[...])
    h = jnp.tanh(jnp.dot(h.astype(jnp.bfloat16), wa_ref[...],
                         preferred_element_type=jnp.float32) + ba_ref[...])
    h = _bn(h, g2_ref[...], b2_ref[...])
    h = jnp.tanh(jnp.dot(h.astype(jnp.bfloat16), wb_ref[...],
                         preferred_element_type=jnp.float32) + bb_ref[...])

    # ---- global_exchange ----
    bm = bm_ref[...]                                     # (N, B) one-hot events
    cnt = jnp.sum(bm, axis=0, keepdims=True)             # (1, B)
    sums = lax.dot_general(bm, h, (((0,), (0,)), ((), ())),
                           preferred_element_type=jnp.float32)        # (B, F)
    mean_pe = sums / jnp.maximum(jnp.transpose(cnt), 1.0)
    mean_bc = jnp.dot(bm, mean_pe, preferred_element_type=jnp.float32)

    # TODO(synk): Python loop over events is fine for small batch counts; use a
    # fori_loop / event-tiled grid if n_batches grows large.
    min_bc = jnp.zeros_like(h)
    max_bc = jnp.zeros_like(h)
    for b in range(n_batches):
        mcol = bm[:, b:b + 1]
        min_b = jnp.min(jnp.where(mcol > 0, h, BIG), axis=0, keepdims=True)
        max_b = jnp.max(jnp.where(mcol > 0, h, -BIG), axis=0, keepdims=True)
        min_bc = min_bc + mcol * min_b
        max_bc = max_bc + mcol * max_b

    # ---- output head: Linear(4F, F) on [mean|min|max|x] without concat ----
    out = (jnp.dot(mean_bc.astype(jnp.bfloat16), wm_ref[...],
                   preferred_element_type=jnp.float32)
           + jnp.dot(min_bc.astype(jnp.bfloat16), wmn_ref[...],
                     preferred_element_type=jnp.float32)
           + jnp.dot(max_bc.astype(jnp.bfloat16), wmx_ref[...],
                     preferred_element_type=jnp.float32)
           + jnp.dot(h.astype(jnp.bfloat16), wx_ref[...],
                     preferred_element_type=jnp.float32)
           + bo_ref[...])
    out = jnp.tanh(out)
    o_ref[...] = _bn(out, g3_ref[...], b3_ref[...])


def tail(x, bmask, p):
    n = x.shape[0]
    g1, b1 = p["bn1"]
    wa, ba = p["post1"]
    g2, b2 = p["bn2"]
    wb, bb = p["post2"]
    g3, b3 = p["bn3"]
    # TODO(synk): BatchNorm batch statistics need all hits, so this kernel stays
    # whole-array; restructure as a two-pass tiled reduction before scaling N.
    return pl.pallas_call(
        functools.partial(_tail_kernel, n_batches=bmask.shape[1]),
        out_shape=jax.ShapeDtypeStruct((n, OUT_PAD), jnp.float32),
        in_specs=[_vmem()] * 17,
        out_specs=_vmem(),
        compiler_params=pltpu.CompilerParams(
            vmem_limit_bytes=48 * 1024 * 1024),
    )(x, bmask, g1, b1, wa, ba, g2, b2, wb, bb,
      p["w_mean"], p["w_min"], p["w_max"], p["w_x"], p["b_o"], g3, b3)


# --------------------------------------------------------------------------
# parameters (synthetic, PyTorch-style init; padded to lane-dense widths)
# --------------------------------------------------------------------------

class KeyGen:
    def __init__(self, seed):
        self._key = jax.random.PRNGKey(seed)

    def __call__(self):
        self._key, sub = jax.random.split(self._key)
        return sub


def init_linear(kg, fan_in, fan_out, bias=True):
    lim = 1.0 / np.sqrt(fan_in)
    w = jax.random.uniform(kg(), (fan_in, fan_out), jnp.float32, -lim, lim)
    if not bias:
        return w
    b = jax.random.uniform(kg(), (1, fan_out), jnp.float32, -lim, lim)
    return w, b


def _pad_cols(w, n):
    return jnp.pad(w, ((0, 0), (0, n - w.shape[1])))


def _pad_rows(w, n):
    return jnp.pad(w, ((0, n - w.shape[0]), (0, 0)))


def init_bn(f, f_pad):
    # PyTorch BatchNorm1d default affine init (gamma=1, beta=0); padded lanes
    # get gamma=beta=0 so they stay exactly zero through the block.
    g = jnp.zeros((1, f_pad), jnp.float32).at[:, :f].set(1.0)
    b = jnp.zeros((1, f_pad), jnp.float32)
    return g, b


def init_gravnet_block(kg, in_ch, out_ch=OUT_CH, space_dim=SPACE_DIM,
                       prop_dim=PROP_DIM):
    sh = space_dim + prop_dim
    p = {"space_dim": space_dim, "prop_dim": prop_dim, "out_ch": out_ch}

    w_s, b_s = init_linear(kg, in_ch, space_dim)
    w_h, b_h = init_linear(kg, in_ch, prop_dim)
    w_sh = jnp.zeros((in_ch, SH_PAD), jnp.float32)
    p["w_sh"] = w_sh.at[:, :space_dim].set(w_s).at[:, space_dim:sh].set(w_h)
    b_sh = jnp.zeros((1, SH_PAD), jnp.float32)
    p["b_sh"] = b_sh.at[:, :space_dim].set(b_s).at[:, space_dim:sh].set(b_h)

    w1 = init_linear(kg, in_ch, out_ch, bias=False)            # lin_out1 (no bias)
    p["w1"] = _pad_cols(w1, OUT_PAD).astype(jnp.bfloat16)
    w2full, b_out = init_linear(kg, 2 * prop_dim, out_ch)      # lin_out2
    p["w2"] = _pad_cols(w2full[:prop_dim], OUT_PAD).astype(jnp.bfloat16)
    p["w3"] = _pad_cols(w2full[prop_dim:], OUT_PAD).astype(jnp.bfloat16)
    p["b_out"] = _pad_cols(b_out, OUT_PAD)

    p["bn1"] = init_bn(out_ch, OUT_PAD)
    wa, ba = init_linear(kg, out_ch, HIDDEN)
    p["post1"] = (_pad_rows(wa, OUT_PAD).astype(jnp.bfloat16), ba)
    p["bn2"] = init_bn(HIDDEN, HIDDEN)
    wb, bb = init_linear(kg, HIDDEN, out_ch)
    p["post2"] = (_pad_cols(wb, OUT_PAD).astype(jnp.bfloat16),
                  _pad_cols(bb, OUT_PAD))

    wout, bo = init_linear(kg, 4 * out_ch, out_ch)              # output Linear(4F,F)

    def chunk(i):
        w = wout[i * out_ch:(i + 1) * out_ch]
        return _pad_cols(_pad_rows(w, OUT_PAD), OUT_PAD).astype(jnp.bfloat16)

    p["w_mean"], p["w_min"], p["w_max"], p["w_x"] = (chunk(0), chunk(1),
                                                     chunk(2), chunk(3))
    p["b_o"] = _pad_cols(bo, OUT_PAD)
    p["bn3"] = init_bn(out_ch, OUT_PAD)
    return p


# --------------------------------------------------------------------------
# forward pass
# --------------------------------------------------------------------------

def gravnet_block_forward(p, x, batch_col, batch_row, bmask, k=K_NEIGHBORS):
    h = gravnet_conv(x, batch_col, batch_row, p, k)   # (N, 128) padded
    h = tail(h, bmask, p)                             # (N, 128) padded
    return h[:, :p["out_ch"]]                         # strip the lane padding


# --------------------------------------------------------------------------
# main
# --------------------------------------------------------------------------

if __name__ == "__main__":
    hits_per_event = 48     # >= k=40 so every node has k in-event neighbours
    n_events = 2
    n_hits = hits_per_event * n_events
    in_channels = 64

    key = jax.random.PRNGKey(0)
    kx, _ = jax.random.split(key)
    x = jax.random.normal(kx, (n_hits, in_channels), jnp.float32)
    batch = jnp.repeat(jnp.arange(n_events, dtype=jnp.int32), hits_per_event)
    # TODO(synk): torch.unique(return_counts=True) discovers events dynamically;
    # here the event count is static and membership is passed as batch-id
    # column/row vectors (conv) plus a one-hot mask (global_exchange).
    batch_col = batch.astype(jnp.float32).reshape(n_hits, 1)
    batch_row = batch.astype(jnp.float32).reshape(1, n_hits)
    bmask = (batch[:, None] == jnp.arange(n_events)[None, :]).astype(jnp.float32)

    params = init_gravnet_block(KeyGen(0), in_channels)

    out = gravnet_block_forward(params, x, batch_col, batch_row, bmask,
                                k=K_NEIGHBORS)
    out = jax.block_until_ready(out)
    assert out.shape == (n_hits, 96)
    assert bool(jnp.all(jnp.isfinite(out)))
    print("KERNEL_OK")
</pallas_src>

<mosaic_0001>
module attributes {stable_mosaic.version = 11 : i64} {
  func.func @_project_kernel(%arg0: i32, %arg1: memref<48x64xf32, #tpu.memory_space<vmem>>, %arg2: memref<64x32xf32, #tpu.memory_space<vmem>>, %arg3: memref<1x32xf32, #tpu.memory_space<vmem>>, %arg4: memref<64x128xbf16, #tpu.memory_space<vmem>>, %arg5: memref<48x32xf32, #tpu.memory_space<vmem>>, %arg6: memref<48x128xf32, #tpu.memory_space<vmem>>) attributes {dimension_semantics = [#tpu.dimension_semantics<parallel>], iteration_bounds = array<i64: 2>, scalar_prefetch = 0 : i64, scratch_operands = 0 : i64, tpu.core_type = #tpu.core_type<tc>, window_params = [{transform_indices = @transform_0, window_bounds = array<i64: 48, 64>}, {pipeline_mode = #tpu.pipeline_mode<synchronous>, transform_indices = @transform_1, window_bounds = array<i64: 64, 32>}, {pipeline_mode = #tpu.pipeline_mode<synchronous>, transform_indices = @transform_2, window_bounds = array<i64: 1, 32>}, {pipeline_mode = #tpu.pipeline_mode<synchronous>, transform_indices = @transform_3, window_bounds = array<i64: 64, 128>}, {transform_indices = @transform_4, window_bounds = array<i64: 48, 32>}, {transform_indices = @transform_5, window_bounds = array<i64: 48, 128>}]} {
    %c0 = arith.constant 0 : index
    %c0_0 = arith.constant 0 : index
    %0 = vector.load %arg1[%c0, %c0_0] : memref<48x64xf32, #tpu.memory_space<vmem>>, vector<48x64xf32>
    %c0_1 = arith.constant 0 : index
    %c0_2 = arith.constant 0 : index
    %1 = vector.load %arg2[%c0_1, %c0_2] : memref<64x32xf32, #tpu.memory_space<vmem>>, vector<64x32xf32>
    %cst = arith.constant dense<0.000000e+00> : vector<48x32xf32>
    %2 = tpu.matmul %0, %1, %cst {dimension_numbers = #tpu.dot_dimension_numbers<[1], [0], [0], [1], [0, 0, 1, 1], [], []>} : vector<48x64xf32>, vector<64x32xf32>, vector<48x32xf32> -> vector<48x32xf32>
    %c0_3 = arith.constant 0 : index
    %c0_4 = arith.constant 0 : index
    %3 = vector.load %arg3[%c0_3, %c0_4] : memref<1x32xf32, #tpu.memory_space<vmem>>, vector<1x32xf32>
    %4 = vector.broadcast %3 : vector<1x32xf32> to vector<48x32xf32>
    %5 = arith.addf %2, %4 : vector<48x32xf32>
    %6 = vector.extract_strided_slice %5 {offsets = [0, 0], sizes = [48, 4], strides = [1, 1]} : vector<48x32xf32> to vector<48x4xf32>
    %7 = arith.mulf %6, %6 : vector<48x4xf32>
    %cst_5 = arith.constant dense<0.000000e+00> : vector<48xf32>
    %8 = vector.multi_reduction <add>, %7, %cst_5 [1] : vector<48x4xf32> to vector<48xf32>
    %9 = vector.shape_cast %8 : vector<48xf32> to vector<48x1xf32>
    %10 = tpu.iota {dimensions = array<i32: 1>} : vector<48x32xi32>
    %c26_i32 = arith.constant 26 : i32
    %11 = vector.broadcast %c26_i32 : i32 to vector<48x32xi32>
    %12 = arith.cmpi eq, %10, %11 : vector<48x32xi32>
    %13 = vector.shape_cast %9 : vector<48x1xf32> to vector<48x1xf32>
    %14 = vector.broadcast %13 : vector<48x1xf32> to vector<48x32xf32>
    %15 = arith.select %12, %14, %5 : vector<48x32xi1>, vector<48x32xf32>
    %c0_6 = arith.constant 0 : index
    %c0_7 = arith.constant 0 : index
    %16 = vector.load %arg5[%c0_6, %c0_7] : memref<48x32xf32, #tpu.memory_space<vmem>>, vector<48x32xf32>
    tpu.vector_store %arg5[%c0_6, %c0_7], %15 {strides = array<i32>} : memref<48x32xf32, #tpu.memory_space<vmem>>, vector<48x32xf32>,
    %17 = arith.truncf %0 : vector<48x64xf32> to vector<48x64xbf16>
    %c0_8 = arith.constant 0 : index
    %c0_9 = arith.constant 0 : index
    %18 = vector.load %arg4[%c0_8, %c0_9] : memref<64x128xbf16, #tpu.memory_space<vmem>>, vector<64x128xbf16>
    %cst_10 = arith.constant dense<0.000000e+00> : vector<48x128xf32>
    %19 = tpu.matmul %17, %18, %cst_10 {dimension_numbers = #tpu.dot_dimension_numbers<[1], [0], [0], [1], [0, 0, 1, 1], [], []>} : vector<48x64xbf16>, vector<64x128xbf16>, vector<48x128xf32> -> vector<48x128xf32>
    %c0_11 = arith.constant 0 : index
    %c0_12 = arith.constant 0 : index
    %20 = vector.load %arg6[%c0_11, %c0_12] : memref<48x128xf32, #tpu.memory_space<vmem>>, vector<48x128xf32>
    tpu.vector_store %arg6[%c0_11, %c0_12], %19 {strides = array<i32>} : memref<48x128xf32, #tpu.memory_space<vmem>>, vector<48x128xf32>,
    return
  }
  func.func @transform_0(%arg0: i32) -> (i32, i32) {
    %c0_i32 = arith.constant 0 : i32
    %c0_i32_0 = arith.constant 0 : i32
    return %arg0, %c0_i32 : i32, i32
  }
  func.func @transform_1(%arg0: i32) -> (i32, i32) {
    %c0_i32 = arith.constant 0 : i32
    %c0_i32_0 = arith.constant 0 : i32
    %c0_i32_1 = arith.constant 0 : i32
    return %c0_i32, %c0_i32_0 : i32, i32
  }
  func.func @transform_2(%arg0: i32) -> (i32, i32) {
    %c0_i32 = arith.constant 0 : i32
    %c0_i32_0 = arith.constant 0 : i32
    %c0_i32_1 = arith.constant 0 : i32
    return %c0_i32, %c0_i32_0 : i32, i32
  }
  func.func @transform_3(%arg0: i32) -> (i32, i32) {
    %c0_i32 = arith.constant 0 : i32
    %c0_i32_0 = arith.constant 0 : i32
    %c0_i32_1 = arith.constant 0 : i32
    return %c0_i32, %c0_i32_0 : i32, i32
  }
  func.func @transform_4(%arg0: i32) -> (i32, i32) {
    %c0_i32 = arith.constant 0 : i32
    %c0_i32_0 = arith.constant 0 : i32
    return %arg0, %c0_i32 : i32, i32
  }
  func.func @transform_5(%arg0: i32) -> (i32, i32) {
    %c0_i32 = arith.constant 0 : i32
    %c0_i32_0 = arith.constant 0 : i32
    return %arg0, %c0_i32 : i32, i32
  }
}

</mosaic_0001>

<llo_original>
// kernel: tpu_custom_call.1
$region0: #{tpu_custom_call.1}
  #allocation0 [shape = 'u32[]', space=smem, size = 0x4, offset = 0x4, fixed_abs, tag = 'smem constant byte address 0x4 - core index']
  #allocation1 [shape = 'u32[72,128]{1,0:T(1,128)}', space=vmem, size = 0x9000, scoped, tag = 'internal scratch']
  %s0 = inlined_call_operand.vmem [shape: f32[96,64], index: 0, kind: input, shape index: {}]
  %s1 = inlined_call_operand.vmem [shape: f32[64,32], index: 1, kind: input, shape index: {}]
  %s2 = inlined_call_operand.vmem [shape: f32[1,32], index: 2, kind: input, shape index: {}]
  %s3 = inlined_call_operand.vmem [shape: bf16[64,128], index: 3, kind: input, shape index: {}]
  %s4 = inlined_call_operand.vmem [shape: f32[96,32], index: 4, kind: output, shape index: {0}]
  %s5 = inlined_call_operand.hbm [shape: f32[96,128], index: 5, kind: output, shape index: {1}]
  %6 = xla_tuple %s4, %s5
  %s7 = sld [smem:[#allocation0]]
  $region57: #{tpu_custom_call.1} parent=0
    _
  %s9 = ssub.s32 1, %s7
  %s10 = scalar_select 0, %s9, %s7
  $region1: #{tpu_custom_call.1} parent=0
    #allocation2 [shape = 'u8[49152]{0}', space=vmem, size = 0xc000, scoped, tag = 'output window, operand 1']
    #allocation3 [shape = 's32[2]{0}', space=sflag, size = 0x8, scoped, tag = 'scoped memory for tpu_custom_call.1']
    %11 = vsyncpa [#allocation3], 0
    %s12 = scalar_lea.sflag [#allocation3], 1
    %13 = vsyncpa %s12, 0
    loop: start=0, step=1, limit=4
    $region2: #{tpu_custom_call.1} parent=1 // loop_pre_header
      _
    $region3: #{tpu_custom_call.1} parent=1 // loop_header
      %s15 = sphi 0, %s19
      %p16 = scmp.ge.s32.totalorder %s15, 4
      %s25 = sphi 0, %s27
      %s28 = sphi 0, %s25
      %s29 = sphi 0, %s28
      %s45 = sphi 0, %s29
      %s49 = sphi 0, %s49
      %s51 = sphi 0, %s49
      %s52 = sphi 0, %s51
      %s66 = sphi 0, %s52
      %s70 = sphi 0, %s70
      %s72 = sphi 0, %s70
      %s73 = sphi 0, %s72
      %s87 = sphi 0, %s73
      %s91 = sphi 0, %s91
      %s93 = sphi 0, %s91
      %s94 = sphi 0, %s93
      %s108 = sphi 0, %s94
      %s114 = sphi 0, %s116
      %s117 = sphi 0, %s114
      %s118 = sphi 0, %s117
      %s134 = sphi 0, %s118
      %s140 = sphi 0, %s142
      %s143 = sphi 0, %s140
      %s144 = sphi 0, %s143
      %s160 = sphi 0, %s144
    $region4: #{tpu_custom_call.1} parent=1 // loop_header_branch
      %18 = sbr.rel (%p16) target = $region8
    $region5: #{tpu_custom_call.1} parent=1 // loop_body
      %s20 = ssub.s32 %s15, 1
      %s21 = ssub.s32 %s15, 2
      %s22 = sadd.s32 %s15, 1
      %s23 = ssub.s32 %s15, %s22
      %p24 = scmp.eq.s32.totalorder %s23, 0
      %s26 = sadd.s32 %s25, 1
      %s27 = scalar_select %p24, %s25, %s26
      %p30 = pneg %p24
      %p31 = scmp.eq.s32.totalorder %s15, 1
      %p32 = por %p30, %p31
      %p33 = scmp.ne.s32.totalorder %s25, %s28
      %p34 = scmp.eq.s32.totalorder %s15, 0
      %p35 = por %p33, %p34
      %p36 = scmp.ne.s32.totalorder %s25, %s28
      %p37 = scmp.eq.s32.totalorder %s20, 1
      %p38 = por %p36, %p37
      %p39 = scmp.ne.s32.totalorder %s28, %s29
      %p40 = scmp.eq.s32.totalorder %s20, 0
      %p41 = por %p39, %p40
      %p42 = scmp.ne.s32.totalorder %s28, %s29
      %p43 = scmp.eq.s32.totalorder %s21, 1
      %p44 = por %p42, %p43
      %p46 = scmp.ne.s32.totalorder %s29, %s45
      %p47 = scmp.eq.s32.totalorder %s21, 0
      %p48 = por %p46, %p47
      %s50 = sadd.s32 %s49, 1
      %p53 = scmp.eq.s32.totalorder %s15, 1
      %p54 = scmp.ne.s32.totalorder %s49, %s51
      %p55 = scmp.eq.s32.totalorder %s15, 0
      %p56 = por %p54, %p55
      %p57 = scmp.ne.s32.totalorder %s49, %s51
      %p58 = scmp.eq.s32.totalorder %s20, 1
      %p59 = por %p57, %p58
      %p60 = scmp.ne.s32.totalorder %s51, %s52
      %p61 = scmp.eq.s32.totalorder %s20, 0
      %p62 = por %p60, %p61
      %p63 = scmp.ne.s32.totalorder %s51, %s52
      %p64 = scmp.eq.s32.totalorder %s21, 1
      %p65 = por %p63, %p64
      %p67 = scmp.ne.s32.totalorder %s52, %s66
      %p68 = scmp.eq.s32.totalorder %s21, 0
      %p69 = por %p67, %p68
      %s71 = sadd.s32 %s70, 1
      %p74 = scmp.eq.s32.totalorder %s15, 1
      %p75 = scmp.ne.s32.totalorder %s70, %s72
      %p76 = scmp.eq.s32.totalorder %s15, 0
      %p77 = por %p75, %p76
      %p78 = scmp.ne.s32.totalorder %s70, %s72
      %p79 = scmp.eq.s32.totalorder %s20, 1
      %p80 = por %p78, %p79
      %p81 = scmp.ne.s32.totalorder %s72, %s73
      %p82 = scmp.eq.s32.totalorder %s20, 0
      %p83 = por %p81, %p82
      %p84 = scmp.ne.s32.totalorder %s72, %s73
      %p85 = scmp.eq.s32.totalorder %s21, 1
      %p86 = por %p84, %p85
      %p88 = scmp.ne.s32.totalorder %s73, %s87
      %p89 = scmp.eq.s32.totalorder %s21, 0
      %p90 = por %p88, %p89
      %s92 = sadd.s32 %s91, 1
      %p95 = scmp.eq.s32.totalorder %s15, 1
      %p96 = scmp.ne.s32.totalorder %s91, %s93
      %p97 = scmp.eq.s32.totalorder %s15, 0
      %p98 = por %p96, %p97
      %p99 = scmp.ne.s32.totalorder %s91, %s93
      %p100 = scmp.eq.s32.totalorder %s20, 1
      %p101 = por %p99, %p100
      %p102 = scmp.ne.s32.totalorder %s93, %s94
      %p103 = scmp.eq.s32.totalorder %s20, 0
      %p104 = por %p102, %p103
      %p105 = scmp.ne.s32.totalorder %s93, %s94
      %p106 = scmp.eq.s32.totalorder %s21, 1
      %p107 = por %p105, %p106
      %p109 = scmp.ne.s32.totalorder %s94, %s108
      %p110 = scmp.eq.s32.totalorder %s21, 0
      %p111 = por %p109, %p110
      %s112 = ssub.s32 %s15, %s22
      %p113 = scmp.eq.s32.totalorder %s112, 0
      %s115 = sadd.s32 %s114, 1
      %s116 = scalar_select %p113, %s114, %s115
      %p119 = pneg %p113
      %p120 = scmp.eq.s32.totalorder %s15, 1
      %p121 = por %p119, %p120
      %p122 = scmp.ne.s32.totalorder %s114, %s117
      %p123 = scmp.eq.s32.totalorder %s15, 0
      %p124 = por %p122, %p123
      %p125 = scmp.ne.s32.totalorder %s114, %s117
      %p126 = scmp.eq.s32.totalorder %s20, 1
      %p127 = por %p125, %p126
      %p128 = scmp.ne.s32.totalorder %s117, %s118
      %p129 = scmp.eq.s32.totalorder %s20, 0
      %p130 = por %p128, %p129
      %p131 = scmp.ne.s32.totalorder %s117, %s118
      %p132 = scmp.eq.s32.totalorder %s21, 1
      %p133 = por %p131, %p132
      %p135 = scmp.ne.s32.totalorder %s118, %s134
      %p136 = scmp.eq.s32.totalorder %s21, 0
      %p137 = por %p135, %p136
      %s138 = ssub.s32 %s15, %s22
      %p139 = scmp.eq.s32.totalorder %s138, 0
      %s141 = sadd.s32 %s140, 1
      %s142 = scalar_select %p139, %s140, %s141
      %p145 = pneg %p139
      %p146 = scmp.eq.s32.totalorder %s15, 1
      %p147 = por %p145, %p146
      %p148 = scmp.ne.s32.totalorder %s140, %s143
      %p149 = scmp.eq.s32.totalorder %s15, 0
      %p150 = por %p148, %p149
      %p151 = scmp.ne.s32.totalorder %s140, %s143
      %p152 = scmp.eq.s32.totalorder %s20, 1
      %p153 = por %p151, %p152
      %p154 = scmp.ne.s32.totalorder %s143, %s144
      %p155 = scmp.eq.s32.totalorder %s20, 0
      %p156 = por %p154, %p155
      %p157 = scmp.ne.s32.totalorder %s143, %s144
      %p158 = scmp.eq.s32.totalorder %s21, 1
      %p159 = por %p157, %p158
      %p161 = scmp.ne.s32.totalorder %s144, %s160
      %p162 = scmp.eq.s32.totalorder %s21, 0
      %p163 = por %p161, %p162
      %p164 = scmp.le.s32.totalorder 1, %s15
      %p165 = scmp.lt.s32.totalorder %s15, 3
      %p166 = pnand %p164, %p165
      %p167 = pneg %p166
      // Predicated region
      $region9: #{tpu_custom_call.1} parent=5 // pred_check
        _
      $region10: #{tpu_custom_call.1} parent=5 // pred_check_branch
        %169 = sbr.rel (%p166) target = $region12
      $region11: #{tpu_custom_call.1} parent=5 // pred_region
        %s170 = ssub.s32 %s15, 1
        // Predicated region
        $region13: #{tpu_custom_call.1} parent=11 // pred_check
          %p171 = pneg %p62
        $region14: #{tpu_custom_call.1} parent=11 // pred_check_branch
          %173 = sbr.rel (%p171) target = $region16
        $region15: #{tpu_custom_call.1} parent=11 // pred_region
          _
        $region16: #{tpu_custom_call.1} parent=11 // pred_fallthru
          _
        // Predicated region
        $region17: #{tpu_custom_call.1} parent=11 // pred_check
          %p174 = pneg %p83
        $region18: #{tpu_custom_call.1} parent=11 // pred_check_branch
          %176 = sbr.rel (%p174) target = $region20
        $region19: #{tpu_custom_call.1} parent=11 // pred_region
          _
        $region20: #{tpu_custom_call.1} parent=11 // pred_fallthru
          _
        // Predicated region
        $region21: #{tpu_custom_call.1} parent=11 // pred_check
          %p177 = pneg %p104
        $region22: #{tpu_custom_call.1} parent=11 // pred_check_branch
          %179 = sbr.rel (%p177) target = $region24
        $region23: #{tpu_custom_call.1} parent=11 // pred_region
          _
        $region24: #{tpu_custom_call.1} parent=11 // pred_fallthru
          _
      $region12: #{tpu_custom_call.1} parent=5 // pred_fallthru
        _
      %p180 = scmp.lt.s32.totalorder %s15, 2
      // Predicated region
      $region25: #{tpu_custom_call.1} parent=5 // pred_check
        %p181 = pneg %p180
      $region26: #{tpu_custom_call.1} parent=5 // pred_check_branch
        %183 = sbr.rel (%p181) target = $region28
      $region27: #{tpu_custom_call.1} parent=5 // pred_region
        // Predicated region
        $region29: #{tpu_custom_call.1} parent=27 // pred_check
          %p184 = pneg %p35
        $region30: #{tpu_custom_call.1} parent=27 // pred_check_branch
          %186 = sbr.rel (%p184) target = $region32
        $region31: #{tpu_custom_call.1} parent=27 // pred_region
          %s187 = smul.u32 6, %s15
          %p188 = scmp.lt.s32.totalorder %s187, 11
          %s189 = scalar_select %p188, %s187, 11
          %s190 = smul.addr %s189, 8
          %s191 = scalar_lea.vmem %s0, %s190
          %s192 = smul.u32 6, %s15
        $region32: #{tpu_custom_call.1} parent=27 // pred_fallthru
          _
      $region28: #{tpu_custom_call.1} parent=5 // pred_fallthru
        _
      %p193 = scmp.le.s32.totalorder 1, %s15
      %p194 = scmp.lt.s32.totalorder %s15, 3
      %p195 = pnand %p193, %p194
      %p196 = pneg %p195
      // Predicated region
      $region33: #{tpu_custom_call.1} parent=5 // pred_check
        _
      $region34: #{tpu_custom_call.1} parent=5 // pred_check_branch
        %198 = sbr.rel (%p195) target = $region36
      $region35: #{tpu_custom_call.1} parent=5 // pred_region
        %s199 = ssub.s32 %s15, 1
        %s200 = smul.u32 6, %s20
        %p201 = scmp.lt.s32.totalorder %s200, 11
        %s202 = scalar_select %p201, %s200, 11
        %s203 = smul.addr %s202, 8
        %s204 = scalar_lea.vmem %s0, %s203
        %p205 = pneg %p41
        %p206 = pneg %p38
        %p207 = pneg %p62
        %p208 = pneg %p59
        %p209 = pneg %p83
        %p210 = pneg %p80
        %p211 = pneg %p104
        %p212 = pneg %p101
        %p213 = pneg %p130
        %p214 = pneg %p127
        %s215 = smul.u32 6, %s20
        %p216 = scmp.lt.s32.totalorder %s215, 11
        %s217 = scalar_select %p216, %s215, 11
        %s218 = smul.addr %s217, 8
        %s219 = scalar_lea.vmem %s4, %s218
        %p220 = pneg %p156
        %p221 = pneg %p153
        %s222 = sand.u32 %s143, 1
        %s223 = scalar_lea.sflag [#allocation3], %s222
        %s224 = sand.u32 %s143, 1
        %s225 = smul.addr %s224, 48
        %s226 = scalar_lea.vmem [#allocation2], %s225
        %s227 = smul.u32 6, %s20
        %p228 = scmp.lt.s32.totalorder %s227, 11
        %s229 = scalar_select %p228, %s227, 11
        %s230 = smul.addr %s229, 8
        %s231 = scalar_lea.vmem %s0, %s230
        %s232 = smul.u32 6, %s20
        %s233 = smul.u32 6, %s20
        %p234 = scmp.lt.s32.totalorder %s233, 11
        %s235 = scalar_select %p234, %s233, 11
        %s236 = smul.addr %s235, 8
        %s237 = scalar_lea.vmem %s4, %s236
        %s238 = smul.u32 6, %s20
        %s239 = smul.u32 6, %s20
        %v241 = vld [vmem:[%s231] sm:$0xff]
        %v242 = vld [vmem:[%s231 + $0x8] sm:$0xff]
        %v243 = vld [vmem:[%s231 + $0x10] sm:$0xff]
        %v244 = vld [vmem:[%s231 + $0x18] sm:$0xff]
        %v245 = vld [vmem:[%s231 + $0x20] sm:$0xff]
        %v246 = vld [vmem:[%s231 + $0x28] sm:$0xff]
        %v247 = vld [vmem:[%s1] sm:$0xff]
        %v248 = vld [vmem:[%s1 + $0x8] sm:$0xff]
        %v249 = vld [vmem:[%s1 + $0x10] sm:$0xff]
        %v250 = vld [vmem:[%s1 + $0x18] sm:$0xff]
        %v251 = vld [vmem:[%s1 + $0x20] sm:$0xff]
        %v252 = vld [vmem:[%s1 + $0x28] sm:$0xff]
        %v253 = vld [vmem:[%s1 + $0x30] sm:$0xff]
        %v254 = vld [vmem:[%s1 + $0x38] sm:$0xff]
        %v255 = vld [vmem:[%s2] sm:$0x1]
        %v257 = vperm.slane %v255, 0
        %vm259 = vcmask 523264
        %v261 = vsel %vm259, %v241, 0
        %v264 = vsel %vm259, %v242, 0
        %v267 = vsel %vm259, %v243, 0
        %v270 = vsel %vm259, %v244, 0
        %v273 = vsel %vm259, %v245, 0
        %v276 = vsel %vm259, %v246, 0
        %278 = vmatpush.msra.mxu0 0.0
        %279 = vmatpush.msra.mxu0 0.0
        %280 = vmatpush.msra.mxu0 0.0
        %281 = vmatpush.msra.mxu0 0.0
        %282 = vmatpush.msra.mxu0 0.0
        %283 = vmatpush.msra.mxu0 0.0
        %284 = vmatpush.msra.mxu0 0.0
        %285 = vmatpush.msra.mxu0 0.0
        %286 = vmatpush.msra.mxu0 %v254
        %287 = vmatpush.msra.mxu0 %v253
        %288 = vmatpush.msra.mxu0 %v252
        %289 = vmatpush.msra.mxu0 %v251
        %290 = vmatpush.msra.mxu0 %v250
        %291 = vmatpush.msra.mxu0 %v249
        %292 = vmatpush.msra.mxu0 %v248
        %293 = vmatpush.msra.mxu0 %v247
        %294 = vmatmul.f32.gmra.mxu0 %v261
        %v295 = vpop.f32.mrf.mxu0
        %v296 = vadd.f32 %v257, %v295
        %297 = vmatmul.f32.gmra.mxu0 %v264
        %v298 = vpop.f32.mrf.mxu0
        %v299 = vadd.f32 %v257, %v298
        %300 = vmatmul.f32.gmra.mxu0 %v267
        %v301 = vpop.f32.mrf.mxu0
        %v302 = vadd.f32 %v257, %v301
        %303 = vmatmul.f32.gmra.mxu0 %v270
        %v304 = vpop.f32.mrf.mxu0
        %v305 = vadd.f32 %v257, %v304
        %306 = vmatmul.f32.gmra.mxu0 %v273
        %v307 = vpop.f32.mrf.mxu0
        %v308 = vadd.f32 %v257, %v307
        %309 = vmatmul.f32.gmra.mxu0 %v276
        %v310 = vpop.f32.mrf.mxu0
        %v311 = vadd.f32 %v257, %v310
        %312 = vdwg.mxu0
        %v313 = vmul.f32 %v296, %v296
        %v314 = vmul.f32 %v299, %v299
        %v315 = vmul.f32 %v302, %v302
        %v316 = vmul.f32 %v305, %v305
        %v317 = vmul.f32 %v308, %v308
        %v318 = vmul.f32 %v311, %v311
        %vm319 = vcmask 31744
        %v320 = vsel %vm319, %v313, 0.0
        %321 = vadd.xlane.f32.xlu0 %v320
        %v322 = vpop.xlane.xlu0 %321
        %v323 = vsel %vm319, %v314, 0.0
        %324 = vadd.xlane.f32.xlu0 %v323
        %v325 = vpop.xlane.xlu0 %324
        %v326 = vsel %vm319, %v315, 0.0
        %327 = vadd.xlane.f32.xlu0 %v326
        %v328 = vpop.xlane.xlu0 %327
        %v329 = vsel %vm319, %v316, 0.0
        %330 = vadd.xlane.f32.xlu0 %v329
        %v331 = vpop.xlane.xlu0 %330
        %v332 = vsel %vm319, %v317, 0.0
        %333 = vadd.xlane.f32.xlu0 %v332
        %v334 = vpop.xlane.xlu0 %333
        %v335 = vsel %vm319, %v318, 0.0
        %336 = vadd.xlane.f32.xlu0 %v335
        %v337 = vpop.xlane.xlu0 %336
        %v338 = vlaneseq
        %v339 = vand.u32 %v338, 127
        %vm340 = vcmp.eq.s32.totalorder %v339, 26
        %v341 = vsel %vm340, %v322, %v296
        %v342 = vsel %vm340, %v325, %v299
        %v343 = vsel %vm340, %v328, %v302
        %v344 = vsel %vm340, %v331, %v305
        %v345 = vsel %vm340, %v334, %v308
        %v346 = vsel %vm340, %v337, %v311
        %vm347 = vcmask 261120
        %348 = vst.msk [vmem:[%s237] sm:$0xff] %vm347, %v341
        %349 = vst.msk [vmem:[%s237 + $0x8] sm:$0xff] %vm347, %v342
        %350 = vst.msk [vmem:[%s237 + $0x10] sm:$0xff] %vm347, %v343
        %351 = vst.msk [vmem:[%s237 + $0x18] sm:$0xff] %vm347, %v344
        %352 = vst.msk [vmem:[%s237 + $0x20] sm:$0xff] %vm347, %v345
        %353 = vst.msk [vmem:[%s237 + $0x28] sm:$0xff] %vm347, %v346
        %v354 = vpack.c.bf16 %v242, %v241
        %v355 = vpack.c.bf16 %v244, %v243
        %v356 = vpack.c.bf16 %v246, %v245
        %v357 = vld [vmem:[%s3] sm:$0xf]
        %v358 = vld [vmem:[%s3 + $0x4] sm:$0xf]
        %v359 = vld [vmem:[%s3 + $0x8] sm:$0xf]
        %v360 = vld [vmem:[%s3 + $0xc] sm:$0xf]
        %v361 = vld [vmem:[%s3 + $0x10] sm:$0xf]
        %v362 = vld [vmem:[%s3 + $0x14] sm:$0xf]
        %v363 = vld [vmem:[%s3 + $0x18] sm:$0xf]
        %v364 = vld [vmem:[%s3 + $0x1c] sm:$0xf]
        %v373 = vunpack.c.l.b16 %v357
        %v374 = vunpack.c.l.b16 %v358
        %v375 = vunpack.c.l.b16 %v359
        %v376 = vunpack.c.l.b16 %v360
        %v377 = vunpack.c.l.b16 %v361
        %v378 = vunpack.c.l.b16 %v362
        %v379 = vunpack.c.l.b16 %v363
        %v380 = vunpack.c.l.b16 %v364
        %v381 = vpack.c.b16 %v374, %v373
        %v382 = vpack.c.b16 %v376, %v375
        %v383 = vpack.c.b16 %v378, %v377
        %v384 = vpack.c.b16 %v380, %v379
        %v390 = vsel %vm259, %v354, 0
        %v393 = vsel %vm259, %v355, 0
        %v396 = vsel %vm259, %v356, 0
        %398 = vmatpush.bf16.msra.mxu0 0
        %399 = vmatpush.bf16.msra.mxu0 0
        %400 = vmatpush.bf16.msra.mxu0 0
        %401 = vmatpush.bf16.msra.mxu0 0
        %402 = vmatpush.bf16.msra.mxu0 %v384
        %403 = vmatpush.bf16.msra.mxu0 %v383
        %404 = vmatpush.bf16.msra.mxu0 %v382
        %405 = vmatpush.bf16.msra.mxu0 %v381
        %406 = vmatmul.bf16.gmra.mxu0 %v390
        %v407 = vpop.f32.mrf.mxu0
        %v408 = vadd.f32 0.0, %v407
        %v409 = vpop.f32.mrf.mxu0
        %v410 = vadd.f32 0.0, %v409
        %411 = vmatmul.bf16.gmra.mxu0 %v393
        %v412 = vpop.f32.mrf.mxu0
        %v413 = vadd.f32 0.0, %v412
        %v414 = vpop.f32.mrf.mxu0
        %v415 = vadd.f32 0.0, %v414
        %416 = vmatmul.bf16.gmra.mxu0 %v396
        %v417 = vpop.f32.mrf.mxu0
        %v418 = vadd.f32 0.0, %v417
        %v419 = vpop.f32.mrf.mxu0
        %v420 = vadd.f32 0.0, %v419
        %421 = vdwg.mxu0
        %422 = vst [vmem:[%s226] sm:$0xff] %v408
        %423 = vst [vmem:[%s226 + $0x8] sm:$0xff] %v410
        %424 = vst [vmem:[%s226 + $0x10] sm:$0xff] %v413
        %425 = vst [vmem:[%s226 + $0x18] sm:$0xff] %v415
        %426 = vst [vmem:[%s226 + $0x20] sm:$0xff] %v418
        %427 = vst [vmem:[%s226 + $0x28] sm:$0xff] %v420
        %s428 = smul.u32 6, %s20
        %p429 = scmp.lt.s32.totalorder %s428, 11
        %s430 = scalar_select %p429, %s428, 11
        %s431 = smul.addr %s430, 8
        %s432 = scalar_lea.vmem %s4, %s431
        %s433 = sand.u32 %s143, 1
        %s434 = scalar_lea.sflag [#allocation3], %s433
        %s435 = sand.u32 %s143, 1
        %s436 = smul.addr %s435, 48
        %s437 = scalar_lea.vmem [#allocation2], %s436
        // Predicated region
        $region37: #{tpu_custom_call.1} parent=35 // pred_check
          %p438 = pneg %p127
        $region38: #{tpu_custom_call.1} parent=35 // pred_check_branch
          %440 = sbr.rel (%p438) target = $region40
        $region39: #{tpu_custom_call.1} parent=35 // pred_region
          %s441 = smul.u32 6, %s20
        $region40: #{tpu_custom_call.1} parent=35 // pred_fallthru
          _
        // Predicated region
        $region41: #{tpu_custom_call.1} parent=35 // pred_check
          %p442 = pneg %p153
        $region42: #{tpu_custom_call.1} parent=35 // pred_check_branch
          %444 = sbr.rel (%p442) target = $region44
        $region43: #{tpu_custom_call.1} parent=35 // pred_region
          %s445 = smul.u32 6, %s20
          %447 = vsyncadd %s434, 0
          %s448 = smul.addr %s445, 8
          %s449 = scalar_lea.hbm %s5, %s448
          %s450 = sshll.u32 %s437, 4
          %s451 = int_to_ptr.vmem [resolvable:$true] %s450
          %s452 = sshll.u32 %s449, 4
          %s453 = int_to_ptr.hbm [resolvable:$true] %s452
          %458 = dma.vmem_to_hbm [thread:$0]  %s451, 768, %s453, %s434, 128, 128, 8
        $region44: #{tpu_custom_call.1} parent=35 // pred_fallthru
          _
      $region36: #{tpu_custom_call.1} parent=5 // pred_fallthru
        _
      %p459 = scmp.le.s32.totalorder 2, %s15
      // Predicated region
      $region45: #{tpu_custom_call.1} parent=5 // pred_check
        %p460 = pneg %p459
      $region46: #{tpu_custom_call.1} parent=5 // pred_check_branch
        %462 = sbr.rel (%p460) target = $region48
      $region47: #{tpu_custom_call.1} parent=5 // pred_region
        %s463 = ssub.s32 %s15, 2
        // Predicated region
        $region49: #{tpu_custom_call.1} parent=47 // pred_check
          %p464 = pneg %p133
        $region50: #{tpu_custom_call.1} parent=47 // pred_check_branch
          %466 = sbr.rel (%p464) target = $region52
        $region51: #{tpu_custom_call.1} parent=47 // pred_region
          %s467 = smul.u32 6, %s21
          %p468 = scmp.lt.s32.totalorder %s467, 11
          %s469 = scalar_select %p468, %s467, 11
          %s470 = smul.addr %s469, 8
          %s471 = scalar_lea.vmem %s4, %s470
        $region52: #{tpu_custom_call.1} parent=47 // pred_fallthru
          _
        // Predicated region
        $region53: #{tpu_custom_call.1} parent=47 // pred_check
          %p472 = pneg %p159
        $region54: #{tpu_custom_call.1} parent=47 // pred_check_branch
          %474 = sbr.rel (%p472) target = $region56
        $region55: #{tpu_custom_call.1} parent=47 // pred_region
          %s475 = sand.u32 %s144, 1
          %s476 = scalar_lea.sflag [#allocation3], %s475
          %s477 = sand.u32 %s144, 1
          %s478 = smul.addr %s477, 48
          %s479 = scalar_lea.vmem [#allocation2], %s478
          %481 = dma.done %s476, 768
        $region56: #{tpu_custom_call.1} parent=47 // pred_fallthru
          _
      $region48: #{tpu_custom_call.1} parent=5 // pred_fallthru
        _
    $region6: #{tpu_custom_call.1} parent=1 // loop_footer
      %s19 = sadd.s32 1, %s15
    $region7: #{tpu_custom_call.1} parent=1 // loop_footer_branch
      %14 = sbr.rel target = $region3
    $region8: #{tpu_custom_call.1} parent=1 // loop_exit
      _
    %482 = vsyncpa [#allocation3], 1
    %s483 = scalar_lea.sflag [#allocation3], 1
    %484 = vsyncpa %s483, 1

</llo_original>
